<compile_context>
chip_gen: v7x
topology: tpu7x:2x2x1
jax: 0.10.0
libtpu: 0.0.40
codegen_flags: <defaults>
</compile_context>

<pallas_src>
import functools

import jax
import jax.numpy as jnp
from jax import lax
from jax.experimental import pallas as pl
from jax.experimental.pallas import tpu as pltpu


def _round_up(n, m):
    return ((n + m - 1) // m) * m


def _pad_to(w, rows, cols):
    return jnp.pad(w, ((0, rows - w.shape[0]), (0, cols - w.shape[1])))


def _joint_kernel(
    num_classes, batch,
    x_ref, label_ref,
    wext_ref, bext_ref,      # fused block-diagonal modality extractor
    wf_ref, bf_ref,          # fusion linear (lane-padded)
    w1_ref, b1_ref,          # fc1 (lane-padded)
    w2_ref, b2_ref,          # fc2 (lane-padded)
    logits_ref, loss_ref,
):
    relu = lambda v: jnp.maximum(v, 0.0)
    mxu_dtype = wext_ref.dtype

    # --- all three modality linears as one block-diagonal matmul + ReLU ---
    feats = relu(
        jnp.dot(x_ref[...], wext_ref[...], preferred_element_type=jnp.float32)
        + bext_ref[...]
    )

    # --- fusion + ReLU (+ dropout: eval-mode identity) ---
    fused = relu(
        jnp.dot(feats.astype(mxu_dtype), wf_ref[...],
                preferred_element_type=jnp.float32)
        + bf_ref[...]
    )

    # --- fc1 + ReLU ---
    hidden = relu(
        jnp.dot(fused.astype(mxu_dtype), w1_ref[...],
                preferred_element_type=jnp.float32)
        + b1_ref[...]
    )

    # --- fc2 -> lane-dense padded logits ---
    logits = (
        jnp.dot(hidden.astype(mxu_dtype), w2_ref[...],
                preferred_element_type=jnp.float32)
        + b2_ref[...]
    )
    logits_ref[...] = logits  # [B_pad, cls_pad]; extra rows/cols are padding

    # --- cross-entropy (mean over the real batch) over valid columns/rows ---
    Bp, cls_pad = logits.shape
    col = lax.broadcasted_iota(jnp.int32, (Bp, cls_pad), 1)
    row = lax.broadcasted_iota(jnp.int32, (Bp, cls_pad), 0)
    col_valid = col < num_classes
    row_valid = row < batch

    masked = jnp.where(col_valid, logits, jnp.float32(-1e30))
    m = jnp.max(masked, axis=-1, keepdims=True)
    expv = jnp.where(col_valid, jnp.exp(masked - m), 0.0)
    lse = jnp.log(jnp.sum(expv, axis=-1, keepdims=True)) + m
    logp = masked - lse

    onehot = jnp.where(row_valid & (label_ref[...] == col), 1.0, 0.0)  # in-kernel one-hot
    loss_ref[0, 0] = -jnp.sum(onehot * logp) / jnp.float32(batch)


def fuse_and_pad_params(params, num_classes, mxu_dtype=jnp.bfloat16):
    """Builds the block-diagonal extractor weight and lane-dense padded layers once."""
    wt, bt = params["wt"], params["bt"]
    wi, bi = params["wi"], params["bi"]
    wd, bd = params["wd"], params["bd"]
    wf, bf = params["wf"], params["bf"]
    w1, b1 = params["w1"], params["b1"]
    w2, b2 = params["w2"], params["b2"]

    k_in = wt.shape[0] + wi.shape[0] + wd.shape[0]
    k_in_p = _round_up(k_in, 128)
    feat = wt.shape[1] + wi.shape[1] + wd.shape[1]
    feat_p = _round_up(feat, 128)
    fuse_p = _round_up(wf.shape[1], 128)
    hid_p = _round_up(w1.shape[1], 128)
    cls_p = _round_up(num_classes, 128)

    wext = jnp.zeros((k_in_p, feat_p), jnp.float32)
    r = c = 0
    for w in (wt, wi, wd):
        wext = wext.at[r:r + w.shape[0], c:c + w.shape[1]].set(w)
        r += w.shape[0]
        c += w.shape[1]
    bext = _pad_to(jnp.concatenate([bt, bi, bd], axis=1), 1, feat_p)

    return dict(
        k_in=k_in,
        wext=wext.astype(mxu_dtype), bext=bext,
        wf=_pad_to(wf, feat_p, fuse_p).astype(mxu_dtype), bf=_pad_to(bf, 1, fuse_p),
        w1=_pad_to(w1, fuse_p, hid_p).astype(mxu_dtype), b1=_pad_to(b1, 1, hid_p),
        w2=_pad_to(w2, hid_p, cls_p).astype(mxu_dtype), b2=_pad_to(b2, 1, cls_p),
    )


def joint_text_image_dialogue_forward(text, image_nchw, dialogue, label,
                                      fused_params, num_classes):
    """Runs the fused forward pass. Returns (logits [B, num_classes], loss scalar)."""
    B = text.shape[0]
    B_pad = _round_up(B, 8)
    k_in_p = fused_params["wext"].shape[0]
    cls_p = fused_params["w2"].shape[1]

    image_flat = image_nchw.reshape(B, -1)
    x = jnp.concatenate(
        [text.astype(jnp.float32), image_flat.astype(jnp.float32),
         dialogue.astype(jnp.float32)], axis=1,
    )
    # Zero-pad batch to a sublane multiple and K to a lane multiple (padded
    # rows/cols multiply zero weight rows -> exact).
    x = jnp.pad(x, ((0, B_pad - B), (0, k_in_p - x.shape[1])))
    x = x.astype(fused_params["wext"].dtype)                # bf16 MXU operand

    label2d = jnp.pad(label.astype(jnp.int32).reshape(B, 1),
                      ((0, B_pad - B), (0, 0)))             # padded rows masked in-kernel

    # NOTE: for real batch sizes (>=256) add a "parallel" batch grid axis so v7x
    # shards across both TensorCores; at B=2 a gridless single-buffered call is best.
    in_specs = [pl.BlockSpec(memory_space=pltpu.MemorySpace.VMEM) for _ in range(10)]
    out_specs = (
        pl.BlockSpec(memory_space=pltpu.MemorySpace.VMEM),  # lane-dense padded logits
        pl.BlockSpec(memory_space=pltpu.MemorySpace.SMEM),  # scalar loss
    )
    out_shape = (
        jax.ShapeDtypeStruct((B_pad, cls_p), jnp.float32),
        jax.ShapeDtypeStruct((1, 1), jnp.float32),
    )

    logits_p, loss = pl.pallas_call(
        functools.partial(_joint_kernel, num_classes, B),
        in_specs=in_specs,
        out_specs=out_specs,
        out_shape=out_shape,
        compiler_params=pltpu.CompilerParams(vmem_limit_bytes=32 * 1024 * 1024),
    )(
        x, label2d,
        fused_params["wext"], fused_params["bext"],
        fused_params["wf"], fused_params["bf"],
        fused_params["w1"], fused_params["b1"],
        fused_params["w2"], fused_params["b2"],
    )
    return logits_p[:B, :num_classes], loss[0, 0]


def _linear_params(key, fan_in, fan_out):
    """Deterministic init mimicking torch.nn.Linear (uniform +/- 1/sqrt(fan_in))."""
    kw, kb = jax.random.split(key)
    bound = 1.0 / jnp.sqrt(jnp.float32(fan_in))
    w = jax.random.uniform(kw, (fan_in, fan_out), jnp.float32, -bound, bound)
    b = jax.random.uniform(kb, (1, fan_out), jnp.float32, -bound, bound)
    return w, b


if __name__ == "__main__":
    # Small, deterministic problem sizes consistent with the module's forward.
    B = 2
    num_classes = 4
    text_in = 16
    C, H, W = 4, 8, 8                 # image is NCHW
    dialogue_in = 24
    text_feature_dim = 32
    image_feature_dim = 32
    dialogue_feature_dim = 32
    fusion_output_size = 64
    hidden_size = 32
    dropout_p = 0.1                   # unused at eval time (identity)

    root = jax.random.PRNGKey(0)
    keys = jax.random.split(root, 10)

    wt, bt = _linear_params(keys[0], text_in, text_feature_dim)
    wi, bi = _linear_params(keys[1], C * H * W, image_feature_dim)
    wd, bd = _linear_params(keys[2], dialogue_in, dialogue_feature_dim)
    wf, bf = _linear_params(
        keys[3],
        text_feature_dim + image_feature_dim + dialogue_feature_dim,
        fusion_output_size,
    )
    w1, b1 = _linear_params(keys[4], fusion_output_size, hidden_size)
    w2, b2 = _linear_params(keys[5], hidden_size, num_classes)

    params = dict(wt=wt, bt=bt, wi=wi, bi=bi, wd=wd, bd=bd,
                  wf=wf, bf=bf, w1=w1, b1=b1, w2=w2, b2=b2)
    fused_params = fuse_and_pad_params(params, num_classes)

    text = jax.random.normal(keys[6], (B, text_in), jnp.float32)
    image = jax.random.normal(keys[7], (B, C, H, W), jnp.float32)   # NCHW
    dialogue = jax.random.normal(keys[8], (B, dialogue_in), jnp.float32)
    label = jax.random.randint(keys[9], (B,), 0, num_classes, jnp.int32)

    logits, loss = joint_text_image_dialogue_forward(
        text, image, dialogue, label, fused_params, num_classes
    )
    jax.block_until_ready((logits, loss))

    assert logits.shape == (B, num_classes)
    assert loss.shape == ()
    assert bool(jnp.isfinite(loss))
    assert bool(jnp.all(jnp.isfinite(logits)))
    print("KERNEL_OK")
</pallas_src>

<mosaic_0001>
module attributes {stable_mosaic.version = 11 : i64} {
  func.func @_joint_kernel(%arg0: memref<8x384xbf16, #tpu.memory_space<vmem>>, %arg1: memref<8x1xi32, #tpu.memory_space<vmem>>, %arg2: memref<384x128xbf16, #tpu.memory_space<vmem>>, %arg3: memref<1x128xf32, #tpu.memory_space<vmem>>, %arg4: memref<128x128xbf16, #tpu.memory_space<vmem>>, %arg5: memref<1x128xf32, #tpu.memory_space<vmem>>, %arg6: memref<128x128xbf16, #tpu.memory_space<vmem>>, %arg7: memref<1x128xf32, #tpu.memory_space<vmem>>, %arg8: memref<128x128xbf16, #tpu.memory_space<vmem>>, %arg9: memref<1x128xf32, #tpu.memory_space<vmem>>, %arg10: memref<8x128xf32, #tpu.memory_space<vmem>>, %arg11: memref<1x1xf32, #tpu.memory_space<smem>>) attributes {dimension_semantics = [], scalar_prefetch = 0 : i64, scratch_operands = 0 : i64, tpu.core_type = #tpu.core_type<tc>} {
    %c0 = arith.constant 0 : index
    %c0_0 = arith.constant 0 : index
    %0 = vector.load %arg0[%c0, %c0_0] : memref<8x384xbf16, #tpu.memory_space<vmem>>, vector<8x384xbf16>
    %c0_1 = arith.constant 0 : index
    %c0_2 = arith.constant 0 : index
    %1 = vector.load %arg2[%c0_1, %c0_2] : memref<384x128xbf16, #tpu.memory_space<vmem>>, vector<384x128xbf16>
    %cst = arith.constant dense<0.000000e+00> : vector<8x128xf32>
    %2 = tpu.matmul %0, %1, %cst {dimension_numbers = #tpu.dot_dimension_numbers<[1], [0], [0], [1], [0, 0, 1, 1], [], []>} : vector<8x384xbf16>, vector<384x128xbf16>, vector<8x128xf32> -> vector<8x128xf32>
    %c0_3 = arith.constant 0 : index
    %c0_4 = arith.constant 0 : index
    %3 = vector.load %arg3[%c0_3, %c0_4] : memref<1x128xf32, #tpu.memory_space<vmem>>, vector<1x128xf32>
    %4 = vector.broadcast %3 : vector<1x128xf32> to vector<8x128xf32>
    %5 = arith.addf %2, %4 : vector<8x128xf32>
    %cst_5 = arith.constant 0.000000e+00 : f32
    %6 = vector.broadcast %cst_5 : f32 to vector<8x128xf32>
    %7 = arith.maximumf %5, %6 : vector<8x128xf32>
    %8 = arith.truncf %7 : vector<8x128xf32> to vector<8x128xbf16>
    %c0_6 = arith.constant 0 : index
    %c0_7 = arith.constant 0 : index
    %9 = vector.load %arg4[%c0_6, %c0_7] : memref<128x128xbf16, #tpu.memory_space<vmem>>, vector<128x128xbf16>
    %cst_8 = arith.constant dense<0.000000e+00> : vector<8x128xf32>
    %10 = tpu.matmul %8, %9, %cst_8 {dimension_numbers = #tpu.dot_dimension_numbers<[1], [0], [0], [1], [0, 0, 1, 1], [], []>} : vector<8x128xbf16>, vector<128x128xbf16>, vector<8x128xf32> -> vector<8x128xf32>
    %c0_9 = arith.constant 0 : index
    %c0_10 = arith.constant 0 : index
    %11 = vector.load %arg5[%c0_9, %c0_10] : memref<1x128xf32, #tpu.memory_space<vmem>>, vector<1x128xf32>
    %12 = vector.broadcast %11 : vector<1x128xf32> to vector<8x128xf32>
    %13 = arith.addf %10, %12 : vector<8x128xf32>
    %cst_11 = arith.constant 0.000000e+00 : f32
    %14 = vector.broadcast %cst_11 : f32 to vector<8x128xf32>
    %15 = arith.maximumf %13, %14 : vector<8x128xf32>
    %16 = arith.truncf %15 : vector<8x128xf32> to vector<8x128xbf16>
    %c0_12 = arith.constant 0 : index
    %c0_13 = arith.constant 0 : index
    %17 = vector.load %arg6[%c0_12, %c0_13] : memref<128x128xbf16, #tpu.memory_space<vmem>>, vector<128x128xbf16>
    %cst_14 = arith.constant dense<0.000000e+00> : vector<8x128xf32>
    %18 = tpu.matmul %16, %17, %cst_14 {dimension_numbers = #tpu.dot_dimension_numbers<[1], [0], [0], [1], [0, 0, 1, 1], [], []>} : vector<8x128xbf16>, vector<128x128xbf16>, vector<8x128xf32> -> vector<8x128xf32>
    %c0_15 = arith.constant 0 : index
    %c0_16 = arith.constant 0 : index
    %19 = vector.load %arg7[%c0_15, %c0_16] : memref<1x128xf32, #tpu.memory_space<vmem>>, vector<1x128xf32>
    %20 = vector.broadcast %19 : vector<1x128xf32> to vector<8x128xf32>
    %21 = arith.addf %18, %20 : vector<8x128xf32>
    %cst_17 = arith.constant 0.000000e+00 : f32
    %22 = vector.broadcast %cst_17 : f32 to vector<8x128xf32>
    %23 = arith.maximumf %21, %22 : vector<8x128xf32>
    %24 = arith.truncf %23 : vector<8x128xf32> to vector<8x128xbf16>
    %c0_18 = arith.constant 0 : index
    %c0_19 = arith.constant 0 : index
    %25 = vector.load %arg8[%c0_18, %c0_19] : memref<128x128xbf16, #tpu.memory_space<vmem>>, vector<128x128xbf16>
    %cst_20 = arith.constant dense<0.000000e+00> : vector<8x128xf32>
    %26 = tpu.matmul %24, %25, %cst_20 {dimension_numbers = #tpu.dot_dimension_numbers<[1], [0], [0], [1], [0, 0, 1, 1], [], []>} : vector<8x128xbf16>, vector<128x128xbf16>, vector<8x128xf32> -> vector<8x128xf32>
    %c0_21 = arith.constant 0 : index
    %c0_22 = arith.constant 0 : index
    %27 = vector.load %arg9[%c0_21, %c0_22] : memref<1x128xf32, #tpu.memory_space<vmem>>, vector<1x128xf32>
    %28 = vector.broadcast %27 : vector<1x128xf32> to vector<8x128xf32>
    %29 = arith.addf %26, %28 : vector<8x128xf32>
    %c0_23 = arith.constant 0 : index
    %c0_24 = arith.constant 0 : index
    %30 = vector.load %arg10[%c0_23, %c0_24] : memref<8x128xf32, #tpu.memory_space<vmem>>, vector<8x128xf32>
    tpu.vector_store %arg10[%c0_23, %c0_24], %29 {strides = array<i32>} : memref<8x128xf32, #tpu.memory_space<vmem>>, vector<8x128xf32>,
    %31 = tpu.iota {dimensions = array<i32: 1>} : vector<8x128xi32>
    %32 = tpu.iota {dimensions = array<i32: 0>} : vector<8x128xi32>
    %c4_i32 = arith.constant 4 : i32
    %33 = vector.broadcast %c4_i32 : i32 to vector<8x128xi32>
    %34 = arith.cmpi slt, %31, %33 : vector<8x128xi32>
    %c2_i32 = arith.constant 2 : i32
    %35 = vector.broadcast %c2_i32 : i32 to vector<8x128xi32>
    %36 = arith.cmpi slt, %32, %35 : vector<8x128xi32>
    %cst_25 = arith.constant -1.000000e+30 : f32
    %37 = vector.broadcast %cst_25 : f32 to vector<8x128xf32>
    %38 = arith.select %34, %29, %37 : vector<8x128xi1>, vector<8x128xf32>
    %cst_26 = arith.constant dense<0xFF800000> : vector<8xf32>
    %39 = vector.multi_reduction <maximumf>, %38, %cst_26 [1] : vector<8x128xf32> to vector<8xf32>
    %40 = vector.shape_cast %39 : vector<8xf32> to vector<8x1xf32>
    %41 = vector.broadcast %40 : vector<8x1xf32> to vector<8x128xf32>
    %42 = arith.subf %38, %41 : vector<8x128xf32>
    %43 = math.exp %42 : vector<8x128xf32>
    %cst_27 = arith.constant 0.000000e+00 : f32
    %44 = vector.broadcast %cst_27 : f32 to vector<8x128xf32>
    %45 = arith.select %34, %43, %44 : vector<8x128xi1>, vector<8x128xf32>
    %cst_28 = arith.constant dense<0.000000e+00> : vector<8xf32>
    %46 = vector.multi_reduction <add>, %45, %cst_28 [1] : vector<8x128xf32> to vector<8xf32>
    %47 = vector.shape_cast %46 : vector<8xf32> to vector<8x1xf32>
    %48 = math.log %47 : vector<8x1xf32>
    %49 = arith.addf %48, %40 : vector<8x1xf32>
    %50 = vector.broadcast %49 : vector<8x1xf32> to vector<8x128xf32>
    %51 = arith.subf %38, %50 : vector<8x128xf32>
    %c0_29 = arith.constant 0 : index
    %c0_30 = arith.constant 0 : index
    %52 = vector.load %arg1[%c0_29, %c0_30] : memref<8x1xi32, #tpu.memory_space<vmem>>, vector<8x1xi32>
    %53 = vector.broadcast %52 : vector<8x1xi32> to vector<8x128xi32>
    %54 = arith.cmpi eq, %53, %31 : vector<8x128xi32>
    %55 = arith.andi %36, %54 : vector<8x128xi1>
    %cst_31 = arith.constant 1.000000e+00 : f32
    %cst_32 = arith.constant 0.000000e+00 : f32
    %56 = vector.broadcast %cst_31 : f32 to vector<8x128xf32>
    %57 = vector.broadcast %cst_32 : f32 to vector<8x128xf32>
    %58 = arith.select %55, %56, %57 : vector<8x128xi1>, vector<8x128xf32>
    %59 = arith.mulf %58, %51 : vector<8x128xf32>
    %60 = vector.shape_cast %59 : vector<8x128xf32> to vector<1x8x128xf32>
    %cst_33 = arith.constant dense<0.000000e+00> : vector<1xf32>
    %61 = vector.multi_reduction <add>, %60, %cst_33 [1, 2] : vector<1x8x128xf32> to vector<1xf32>
    %62 = vector.shape_cast %61 : vector<1xf32> to vector<1x1x1xf32>
    %63 = vector.extract %62[0, 0, 0] : f32 from vector<1x1x1xf32>
    %cst_34 = arith.constant 0.000000e+00 : f32
    %64 = arith.subf %cst_34, %63 : f32
    %cst_35 = arith.constant 2.000000e+00 : f32
    %65 = arith.divf %64, %cst_35 : f32
    %c0_36 = arith.constant 0 : index
    %c0_37 = arith.constant 0 : index
    %66 = memref.load %arg11[%c0_36, %c0_37] : memref<1x1xf32, #tpu.memory_space<smem>>
    memref.store %65, %arg11[%c0_36, %c0_37] : memref<1x1xf32, #tpu.memory_space<smem>>
    return
  }
}

</mosaic_0001>

<llo_original>
// kernel: tpu_custom_call.1
$region0: #{tpu_custom_call.1}
  #allocation0 [shape = 'u32[]', space=smem, size = 0x4, offset = 0x4, fixed_abs, tag = 'smem constant byte address 0x4 - core index']
  #allocation1 [shape = 'u32[144,128]{1,0:T(1,128)}', space=vmem, size = 0x12000, scoped, tag = 'internal scratch']
  %s0 = inlined_call_operand.hbm [shape: bf16[8,384], index: 0, kind: input, shape index: {}]
  %s1 = inlined_call_operand.vmem [shape: s32[8,1], index: 1, kind: input, shape index: {}]
  %s2 = inlined_call_operand.hbm [shape: bf16[384,128], index: 2, kind: input, shape index: {}]
  %s3 = inlined_call_operand.vmem [shape: f32[1,128], index: 3, kind: input, shape index: {}]
  %s4 = inlined_call_operand.hbm [shape: bf16[128,128], index: 4, kind: input, shape index: {}]
  %s5 = inlined_call_operand.vmem [shape: f32[1,128], index: 5, kind: input, shape index: {}]
  %s6 = inlined_call_operand.hbm [shape: bf16[128,128], index: 6, kind: input, shape index: {}]
  %s7 = inlined_call_operand.vmem [shape: f32[1,128], index: 7, kind: input, shape index: {}]
  %s8 = inlined_call_operand.hbm [shape: bf16[128,128], index: 8, kind: input, shape index: {}]
  %s9 = inlined_call_operand.vmem [shape: f32[1,128], index: 9, kind: input, shape index: {}]
  %s10 = inlined_call_operand.hbm [shape: f32[8,128], index: 10, kind: output, shape index: {0}]
  %s11 = inlined_call_operand.hbm [shape: f32[1,1], index: 11, kind: output, shape index: {1}]
  %12 = xla_tuple %s10, %s11
  %s13 = sld [smem:[#allocation0]]
  $region78: #{tpu_custom_call.1} parent=0
    _
  %s15 = ssub.s32 1, %s13
  %s16 = scalar_select 0, %s15, %s13
  $region1: #{tpu_custom_call.1} parent=0
    #allocation2 [shape = 'u8[6144]{0}', space=vmem, size = 0x1800, scoped, tag = 'input window, operand 0, single buffered']
    #allocation3 [shape = 's32[1]{0}', space=sflag, size = 0x4, scoped, tag = 'scoped memory for tpu_custom_call.1']
    #allocation4 [shape = 's32[1]{0}', space=sflag, size = 0x4, scoped, tag = 'scoped memory for tpu_custom_call.1']
    #allocation5 [shape = 's32[1]{0}', space=sflag, size = 0x4, scoped, tag = 'scoped memory for tpu_custom_call.1']
    #allocation6 [shape = 'u8[98304]{0}', space=vmem, size = 0x18000, scoped, tag = 'input window, operand 2, single buffered']
    #allocation7 [shape = 's32[1]{0}', space=sflag, size = 0x4, scoped, tag = 'scoped memory for tpu_custom_call.1']
    #allocation8 [shape = 'u8[32768]{0}', space=vmem, size = 0x8000, scoped, tag = 'input window, operand 4, single buffered']
    #allocation9 [shape = 'u8[32768]{0}', space=vmem, size = 0x8000, scoped, tag = 'input window, operand 6, single buffered']
    #allocation10 [shape = 's32[1]{0}', space=sflag, size = 0x4, scoped, tag = 'scoped memory for tpu_custom_call.1']
    #allocation11 [shape = 'u8[32768]{0}', space=vmem, size = 0x8000, scoped, tag = 'input window, operand 8, single buffered']
    #allocation12 [shape = 'u8[4096]{0}', space=vmem, size = 0x1000, scoped, tag = 'output window, operand 0, single buffered']
    #allocation13 [shape = 'u8[512]{0}', space=smem, size = 0x200, scoped, tag = 'output window, operand 1, single buffered']
    %17 = vsyncpa [#allocation3], 0
    %18 = vsyncpa [#allocation7], 0
    %19 = vsyncpa [#allocation10], 0
    %20 = vsyncpa [#allocation4], 0
    %21 = vsyncpa [#allocation5], 0
    // Predicated region
    $region2: #{tpu_custom_call.1} parent=1 // pred_check
      _
    $region3: #{tpu_custom_call.1} parent=1 // pred_check_branch
      %23 = sbr.rel (0) target = $region5
    $region4: #{tpu_custom_call.1} parent=1 // pred_region
      %s25 = ssub.s32 192, 192
      %26 = vsyncadd [#allocation3], %s25
      %s28 = sshll.u32 [#allocation2], 4
      %s29 = int_to_ptr.vmem [resolvable:$true] %s28
      %31 = dma.hbm_to_vmem [thread:$0]  %s0, 192, %s29, [#allocation3]
    $region5: #{tpu_custom_call.1} parent=1 // pred_fallthru
      _
    // Predicated region
    $region6: #{tpu_custom_call.1} parent=1 // pred_check
      _
    $region7: #{tpu_custom_call.1} parent=1 // pred_check_branch
      %33 = sbr.rel (0) target = $region9
    $region8: #{tpu_custom_call.1} parent=1 // pred_region
      _
    $region9: #{tpu_custom_call.1} parent=1 // pred_fallthru
      _
    // Predicated region
    $region10: #{tpu_custom_call.1} parent=1 // pred_check
      _
    $region11: #{tpu_custom_call.1} parent=1 // pred_check_branch
      %35 = sbr.rel (0) target = $region13
    $region12: #{tpu_custom_call.1} parent=1 // pred_region
      %s37 = ssub.s32 3072, 3072
      %38 = vsyncadd [#allocation7], %s37
      %s39 = sshll.u32 [#allocation6], 4
      %s40 = int_to_ptr.vmem [resolvable:$true] %s39
      %45 = dma.hbm_to_vmem [thread:$0]  %s2, 3072, %s40, [#allocation7], 64, 64, 4
    $region13: #{tpu_custom_call.1} parent=1 // pred_fallthru
      _
    // Predicated region
    $region14: #{tpu_custom_call.1} parent=1 // pred_check
      _
    $region15: #{tpu_custom_call.1} parent=1 // pred_check_branch
      %47 = sbr.rel (0) target = $region17
    $region16: #{tpu_custom_call.1} parent=1 // pred_region
      _
    $region17: #{tpu_custom_call.1} parent=1 // pred_fallthru
      _
    // Predicated region
    $region18: #{tpu_custom_call.1} parent=1 // pred_check
      _
    $region19: #{tpu_custom_call.1} parent=1 // pred_check_branch
      %49 = sbr.rel (0) target = $region21
    $region20: #{tpu_custom_call.1} parent=1 // pred_region
      %s51 = ssub.s32 1024, 1024
      %52 = vsyncadd [#allocation7], %s51
      %s53 = sshll.u32 [#allocation8], 4
      %s54 = int_to_ptr.vmem [resolvable:$true] %s53
      %59 = dma.hbm_to_vmem [thread:$0]  %s4, 1024, %s54, [#allocation7], 64, 64, 4
    $region21: #{tpu_custom_call.1} parent=1 // pred_fallthru
      _
    // Predicated region
    $region22: #{tpu_custom_call.1} parent=1 // pred_check
      _
    $region23: #{tpu_custom_call.1} parent=1 // pred_check_branch
      %61 = sbr.rel (0) target = $region25
    $region24: #{tpu_custom_call.1} parent=1 // pred_region
      _
    $region25: #{tpu_custom_call.1} parent=1 // pred_fallthru
      _
    // Predicated region
    $region26: #{tpu_custom_call.1} parent=1 // pred_check
      _
    $region27: #{tpu_custom_call.1} parent=1 // pred_check_branch
      %63 = sbr.rel (0) target = $region29
    $region28: #{tpu_custom_call.1} parent=1 // pred_region
      %s65 = ssub.s32 1024, 1024
      %66 = vsyncadd [#allocation10], %s65
      %s67 = sshll.u32 [#allocation9], 4
      %s68 = int_to_ptr.vmem [resolvable:$true] %s67
      %73 = dma.hbm_to_vmem [thread:$0]  %s6, 1024, %s68, [#allocation10], 64, 64, 4
    $region29: #{tpu_custom_call.1} parent=1 // pred_fallthru
      _
    // Predicated region
    $region30: #{tpu_custom_call.1} parent=1 // pred_check
      _
    $region31: #{tpu_custom_call.1} parent=1 // pred_check_branch
      %75 = sbr.rel (0) target = $region33
    $region32: #{tpu_custom_call.1} parent=1 // pred_region
      _
    $region33: #{tpu_custom_call.1} parent=1 // pred_fallthru
      _
    // Predicated region
    $region34: #{tpu_custom_call.1} parent=1 // pred_check
      _
    $region35: #{tpu_custom_call.1} parent=1 // pred_check_branch
      %77 = sbr.rel (0) target = $region37
    $region36: #{tpu_custom_call.1} parent=1 // pred_region
      %s79 = ssub.s32 1024, 1024
      %80 = vsyncadd [#allocation10], %s79
      %s81 = sshll.u32 [#allocation11], 4
      %s82 = int_to_ptr.vmem [resolvable:$true] %s81
      %87 = dma.hbm_to_vmem [thread:$0]  %s8, 1024, %s82, [#allocation10], 64, 64, 4
    $region37: #{tpu_custom_call.1} parent=1 // pred_fallthru
      _
    // Predicated region
    $region38: #{tpu_custom_call.1} parent=1 // pred_check
      _
    $region39: #{tpu_custom_call.1} parent=1 // pred_check_branch
      %89 = sbr.rel (0) target = $region41
    $region40: #{tpu_custom_call.1} parent=1 // pred_region
      _
    $region41: #{tpu_custom_call.1} parent=1 // pred_fallthru
      _
    // Predicated region
    $region42: #{tpu_custom_call.1} parent=1 // pred_check
      _
    $region43: #{tpu_custom_call.1} parent=1 // pred_check_branch
      %91 = sbr.rel (0) target = $region45
    $region44: #{tpu_custom_call.1} parent=1 // pred_region
      %92 = dma.done [#allocation3], 192
    $region45: #{tpu_custom_call.1} parent=1 // pred_fallthru
      _
    // Predicated region
    $region46: #{tpu_custom_call.1} parent=1 // pred_check
      _
    $region47: #{tpu_custom_call.1} parent=1 // pred_check_branch
      %94 = sbr.rel (0) target = $region49
    $region48: #{tpu_custom_call.1} parent=1 // pred_region
      %95 = dma.done [#allocation7], 3072
    $region49: #{tpu_custom_call.1} parent=1 // pred_fallthru
      _
    // Predicated region
    $region50: #{tpu_custom_call.1} parent=1 // pred_check
      _
    $region51: #{tpu_custom_call.1} parent=1 // pred_check_branch
      %97 = sbr.rel (0) target = $region53
    $region52: #{tpu_custom_call.1} parent=1 // pred_region
      %98 = dma.done [#allocation7], 1024
    $region53: #{tpu_custom_call.1} parent=1 // pred_fallthru
      _
    // Predicated region
    $region54: #{tpu_custom_call.1} parent=1 // pred_check
      _
    $region55: #{tpu_custom_call.1} parent=1 // pred_check_branch
      %100 = sbr.rel (0) target = $region57
    $region56: #{tpu_custom_call.1} parent=1 // pred_region
      %101 = dma.done [#allocation10], 1024
    $region57: #{tpu_custom_call.1} parent=1 // pred_fallthru
      _
    // Predicated region
    $region58: #{tpu_custom_call.1} parent=1 // pred_check
      _
    $region59: #{tpu_custom_call.1} parent=1 // pred_check_branch
      %103 = sbr.rel (0) target = $region61
    $region60: #{tpu_custom_call.1} parent=1 // pred_region
      %104 = dma.done [#allocation10], 1024
    $region61: #{tpu_custom_call.1} parent=1 // pred_fallthru
      _
    %v106 = vld [vmem:[#allocation2] sm:$0xff]
    %v107 = vld [vmem:[#allocation2 + $0x8] sm:$0xf]
    %v108 = vld [vmem:[#allocation6] sm:$0xf]
    %v109 = vld [vmem:[#allocation6 + $0x4] sm:$0xf]
    %v110 = vld [vmem:[#allocation6 + $0x8] sm:$0xf]
    %v111 = vld [vmem:[#allocation6 + $0xc] sm:$0xf]
    %v112 = vld [vmem:[#allocation6 + $0x10] sm:$0xf]
    %v113 = vld [vmem:[#allocation6 + $0x14] sm:$0xf]
    %v114 = vld [vmem:[#allocation6 + $0x18] sm:$0xf]
    %v115 = vld [vmem:[#allocation6 + $0x1c] sm:$0xf]
    %v116 = vld [vmem:[#allocation6 + $0x20] sm:$0xf]
    %v117 = vld [vmem:[#allocation6 + $0x24] sm:$0xf]
    %v118 = vld [vmem:[#allocation6 + $0x28] sm:$0xf]
    %v119 = vld [vmem:[#allocation6 + $0x2c] sm:$0xf]
    %v120 = vld [vmem:[#allocation6 + $0x30] sm:$0xf]
    %v121 = vld [vmem:[#allocation6 + $0x34] sm:$0xf]
    %v122 = vld [vmem:[#allocation6 + $0x38] sm:$0xf]
    %v123 = vld [vmem:[#allocation6 + $0x3c] sm:$0xf]
    %v124 = vld [vmem:[#allocation6 + $0x40] sm:$0xf]
    %v125 = vld [vmem:[#allocation6 + $0x44] sm:$0xf]
    %v126 = vld [vmem:[#allocation6 + $0x48] sm:$0xf]
    %v127 = vld [vmem:[#allocation6 + $0x4c] sm:$0xf]
    %v128 = vld [vmem:[#allocation6 + $0x50] sm:$0xf]
    %v129 = vld [vmem:[#allocation6 + $0x54] sm:$0xf]
    %v130 = vld [vmem:[#allocation6 + $0x58] sm:$0xf]
    %v131 = vld [vmem:[#allocation6 + $0x5c] sm:$0xf]
    %v132 = vld [vmem:[#allocation6 + $0x60] sm:$0xf]
    %v133 = vld [vmem:[#allocation6 + $0x64] sm:$0xf]
    %v134 = vld [vmem:[#allocation6 + $0x68] sm:$0xf]
    %v135 = vld [vmem:[#allocation6 + $0x6c] sm:$0xf]
    %v136 = vld [vmem:[#allocation6 + $0x70] sm:$0xf]
    %v137 = vld [vmem:[#allocation6 + $0x74] sm:$0xf]
    %v138 = vld [vmem:[#allocation6 + $0x78] sm:$0xf]
    %v139 = vld [vmem:[#allocation6 + $0x7c] sm:$0xf]
    %v140 = vld [vmem:[#allocation6 + $0x80] sm:$0xf]
    %v141 = vld [vmem:[#allocation6 + $0x84] sm:$0xf]
    %v142 = vld [vmem:[#allocation6 + $0x88] sm:$0xf]
    %v143 = vld [vmem:[#allocation6 + $0x8c] sm:$0xf]
    %v144 = vld [vmem:[#allocation6 + $0x90] sm:$0xf]
    %v145 = vld [vmem:[#allocation6 + $0x94] sm:$0xf]
    %v146 = vld [vmem:[#allocation6 + $0x98] sm:$0xf]
    %v147 = vld [vmem:[#allocation6 + $0x9c] sm:$0xf]
    %v148 = vld [vmem:[#allocation6 + $0xa0] sm:$0xf]
    %v149 = vld [vmem:[#allocation6 + $0xa4] sm:$0xf]
    %v150 = vld [vmem:[#allocation6 + $0xa8] sm:$0xf]
    %v151 = vld [vmem:[#allocation6 + $0xac] sm:$0xf]
    %v152 = vld [vmem:[#allocation6 + $0xb0] sm:$0xf]
    %v153 = vld [vmem:[#allocation6 + $0xb4] sm:$0xf]
    %v154 = vld [vmem:[#allocation6 + $0xb8] sm:$0xf]
    %v155 = vld [vmem:[#allocation6 + $0xbc] sm:$0xf]
    %v156 = vld [vmem:[%s3] sm:$0x1]
    %v158 = vlaneseq
    %v159 = vshrl.u32 %v158, 7
    %v160 = vsub.s32 0, %v159
    %v161 = vrot.slane %v156, %v160
    %v165 = vunpack.c.l.b16 %v106
    %v166 = vunpack.c.h.b16 %v106
    %v167 = vunpack.c.l.b16 %v107
    %v168 = vpack.c.b16 %v165, %v165
    %v169 = vpack.c.b16 %v166, %v166
    %v170 = vpack.c.b16 %v167, %v167
    %v222 = vunpack.c.l.b16 %v108
    %v223 = vunpack.c.l.b16 %v109
    %v224 = vunpack.c.l.b16 %v110
    %v225 = vunpack.c.l.b16 %v111
    %v226 = vunpack.c.l.b16 %v112
    %v227 = vunpack.c.l.b16 %v113
    %v228 = vunpack.c.l.b16 %v114
    %v229 = vunpack.c.l.b16 %v115
    %v230 = vunpack.c.l.b16 %v116
    %v231 = vunpack.c.l.b16 %v117
    %v232 = vunpack.c.l.b16 %v118
    %v233 = vunpack.c.l.b16 %v119
    %v234 = vunpack.c.l.b16 %v120
    %v235 = vunpack.c.l.b16 %v121
    %v236 = vunpack.c.l.b16 %v122
    %v237 = vunpack.c.l.b16 %v123
    %v238 = vunpack.c.l.b16 %v124
    %v239 = vunpack.c.l.b16 %v125
    %v240 = vunpack.c.l.b16 %v126
    %v241 = vunpack.c.l.b16 %v127
    %v242 = vunpack.c.l.b16 %v128
    %v243 = vunpack.c.l.b16 %v129
    %v244 = vunpack.c.l.b16 %v130
    %v245 = vunpack.c.l.b16 %v131
    %v246 = vunpack.c.l.b16 %v132
    %v247 = vunpack.c.l.b16 %v133
    %v248 = vunpack.c.l.b16 %v134
    %v249 = vunpack.c.l.b16 %v135
    %v250 = vunpack.c.l.b16 %v136
    %v251 = vunpack.c.l.b16 %v137
    %v252 = vunpack.c.l.b16 %v138
    %v253 = vunpack.c.l.b16 %v139
    %v254 = vunpack.c.l.b16 %v140
    %v255 = vunpack.c.l.b16 %v141
    %v256 = vunpack.c.l.b16 %v142
    %v257 = vunpack.c.l.b16 %v143
    %v258 = vunpack.c.l.b16 %v144
    %v259 = vunpack.c.l.b16 %v145
    %v260 = vunpack.c.l.b16 %v146
    %v261 = vunpack.c.l.b16 %v147
    %v262 = vunpack.c.l.b16 %v148
    %v263 = vunpack.c.l.b16 %v149
    %v264 = vunpack.c.l.b16 %v150
    %v265 = vunpack.c.l.b16 %v151
    %v266 = vunpack.c.l.b16 %v152
    %v267 = vunpack.c.l.b16 %v153
    %v268 = vunpack.c.l.b16 %v154
    %v269 = vunpack.c.l.b16 %v155
    %v270 = vpack.c.b16 %v223, %v222
    %v271 = vpack.c.b16 %v225, %v224
    %v272 = vpack.c.b16 %v227, %v226
    %v273 = vpack.c.b16 %v229, %v228
    %v274 = vpack.c.b16 %v231, %v230
    %v275 = vpack.c.b16 %v233, %v232
    %v276 = vpack.c.b16 %v235, %v234
    %v277 = vpack.c.b16 %v237, %v236
    %v278 = vpack.c.b16 %v239, %v238
    %v279 = vpack.c.b16 %v241, %v240
    %v280 = vpack.c.b16 %v243, %v242
    %v281 = vpack.c.b16 %v245, %v244
    %v282 = vpack.c.b16 %v247, %v246
    %v283 = vpack.c.b16 %v249, %v248
    %v284 = vpack.c.b16 %v251, %v250
    %v285 = vpack.c.b16 %v253, %v252
    %v286 = vpack.c.b16 %v255, %v254
    %v287 = vpack.c.b16 %v257, %v256
    %v288 = vpack.c.b16 %v259, %v258
    %v289 = vpack.c.b16 %v261, %v260
    %v290 = vpack.c.b16 %v263, %v262
    %v291 = vpack.c.b16 %v265, %v264
    %v292 = vpack.c.b16 %v267, %v266
    %v293 = vpack.c.b16 %v269, %v268
    %318 = vmatprep.subr.bf16.mxu0 0
    %319 = vmatpush1.bf16.msra.mxu0 %v270
    %320 = vmatprep.subr.bf16.mxu0 0
    %321 = vmatpush1.bf16.msra.mxu0 %v271
    %322 = vmatprep.subr.bf16.mxu0 0
    %323 = vmatpush1.bf16.msra.mxu0 %v272
    %324 = vmatprep.subr.bf16.mxu0 0
    %325 = vmatpush1.bf16.msra.mxu0 %v273
    %326 = vmatprep.subr.bf16.mxu0 0
    %327 = vmatpush1.bf16.msra.mxu0 %v274
    %328 = vmatprep.subr.bf16.mxu0 0
    %329 = vmatpush1.bf16.msra.mxu0 %v275
    %330 = vmatprep.subr.bf16.mxu0 0
    %331 = vmatpush1.bf16.msra.mxu0 %v276
    %332 = vmatprep.subr.bf16.mxu0 0
    %333 = vmatpush1.bf16.msra.mxu0 %v277
    %334 = vmatprep.subr.bf16.mxu0 0
    %335 = vmatpush1.bf16.msra.mxu0 %v278
    %336 = vmatprep.subr.bf16.mxu0 0
    %337 = vmatpush1.bf16.msra.mxu0 %v279
    %338 = vmatprep.subr.bf16.mxu0 0
    %339 = vmatpush1.bf16.msra.mxu0 %v280
    %340 = vmatprep.subr.bf16.mxu0 0
    %341 = vmatpush1.bf16.msra.mxu0 %v281
    %342 = vmatprep.subr.bf16.mxu0 0
    %343 = vmatpush1.bf16.msra.mxu0 %v282
    %344 = vmatprep.subr.bf16.mxu0 0
    %345 = vmatpush1.bf16.msra.mxu0 %v283
    %346 = vmatprep.subr.bf16.mxu0 0
    %347 = vmatpush1.bf16.msra.mxu0 %v284
    %348 = vmatprep.subr.bf16.mxu0 0
    %349 = vmatpush1.bf16.msra.mxu0 %v285
    %350 = vmatprep.mubr.bf16.mxu0 %v169
    %351 = vmatmul.mubr.bf16.gmra.mrb[0].mxu0 %v168
    %v352 = vpop.f32.mrb[0].mxu0
    %v353 = vadd.f32 %v161, %v352
    %v354 = vpop.f32.mrb[0].mxu0
    %v355 = vpop.f32.mrb[0].mxu0
    %v356 = vpop.f32.mrb[0].mxu0
    %357 = vdwg.mxu0
    %358 = vmatprep.subr.bf16.mxu0 0
    %359 = vmatpush1.bf16.msra.mxu0 %v286
    %360 = vmatprep.subr.bf16.mxu0 0
    %361 = vmatpush1.bf16.msra.mxu0 %v287
    %362 = vmatprep.subr.bf16.mxu0 0
    %363 = vmatpush1.bf16.msra.mxu0 %v288
    %364 = vmatprep.subr.bf16.mxu0 0
    %365 = vmatpush1.bf16.msra.mxu0 %v289
    %366 = vmatprep.subr.bf16.mxu0 0
    %367 = vmatpush1.bf16.msra.mxu0 %v290
    %368 = vmatprep.subr.bf16.mxu0 0
    %369 = vmatpush1.bf16.msra.mxu0 %v291
    %370 = vmatprep.subr.bf16.mxu0 0
    %371 = vmatpush1.bf16.msra.mxu0 %v292
    %372 = vmatprep.subr.bf16.mxu0 0
    %373 = vmatpush1.bf16.msra.mxu0 %v293
    %374 = vmatprep.subr.bf16.mxu0 0
    %375 = vmatpush1.bf16.msra.mxu0 0
    %376 = vmatprep.subr.bf16.mxu0 0
    %377 = vmatpush1.bf16.msra.mxu0 0
    %378 = vmatprep.subr.bf16.mxu0 0
    %379 = vmatpush1.bf16.msra.mxu0 0
    %380 = vmatprep.subr.bf16.mxu0 0
    %381 = vmatpush1.bf16.msra.mxu0 0
    %382 = vmatprep.subr.bf16.mxu0 0
    %383 = vmatpush1.bf16.msra.mxu0 0
    %384 = vmatprep.subr.bf16.mxu0 0
    %385 = vmatpush1.bf16.msra.mxu0 0
    %386 = vmatprep.subr.bf16.mxu0 0
    %387 = vmatpush1.bf16.msra.mxu0 0
    %388 = vmatprep.subr.bf16.mxu0 0
    %389 = vmatpush1.bf16.msra.mxu0 0
    %390 = vmatprep.mubr.bf16.mxu0 0
    %391 = vmatmul.mubr.bf16.gmra.mrb[0].mxu0 %v170
    %v392 = vpop.f32.mrb[0].mxu0
    %v393 = vadd.f32 %v353, %v392
    %v394 = vpop.f32.mrb[0].mxu0
    %v395 = vpop.f32.mrb[0].mxu0
    %v396 = vpop.f32.mrb[0].mxu0
    %397 = vdwg.mxu0
    %v398 = vmax.f32 %v393, 0.0
    %v399 = vpack.c.bf16 %v398, %v398
    %v400 = vld [vmem:[#allocation8] sm:$0xf]
    %v401 = vld [vmem:[#allocation8 + $0x4] sm:$0xf]
    %v402 = vld [vmem:[#allocation8 + $0x8] sm:$0xf]
    %v403 = vld [vmem:[#allocation8 + $0xc] sm:$0xf]
    %v404 = vld [vmem:[#allocation8 + $0x10] sm:$0xf]
    %v405 = vld [vmem:[#allocation8 + $0x14] sm:$0xf]
    %v406 = vld [vmem:[#allocation8 + $0x18] sm:$0xf]
    %v407 = vld [vmem:[#allocation8 + $0x1c] sm:$0xf]
    %v408 = vld [vmem:[#allocation8 + $0x20] sm:$0xf]
    %v409 = vld [vmem:[#allocation8 + $0x24] sm:$0xf]
    %v410 = vld [vmem:[#allocation8 + $0x28] sm:$0xf]
    %v411 = vld [vmem:[#allocation8 + $0x2c] sm:$0xf]
    %v412 = vld [vmem:[#allocation8 + $0x30] sm:$0xf]
    %v413 = vld [vmem:[#allocation8 + $0x34] sm:$0xf]
    %v414 = vld [vmem:[#allocation8 + $0x38] sm:$0xf]
    %v415 = vld [vmem:[#allocation8 + $0x3c] sm:$0xf]
    %v416 = vld [vmem:[%s5] sm:$0x1]
    %v418 = vlaneseq
    %v419 = vshrl.u32 %v418, 7
    %v420 = vsub.s32 0, %v419
    %v421 = vrot.slane %v416, %v420
    %v439 = vunpack.c.l.b16 %v400
    %v440 = vunpack.c.l.b16 %v401
    %v441 = vunpack.c.l.b16 %v402
    %v442 = vunpack.c.l.b16 %v403
    %v443 = vunpack.c.l.b16 %v404
    %v444 = vunpack.c.l.b16 %v405
    %v445 = vunpack.c.l.b16 %v406
    %v446 = vunpack.c.l.b16 %v407
    %v447 = vunpack.c.l.b16 %v408
    %v448 = vunpack.c.l.b16 %v409
    %v449 = vunpack.c.l.b16 %v410
    %v450 = vunpack.c.l.b16 %v411
    %v451 = vunpack.c.l.b16 %v412
    %v452 = vunpack.c.l.b16 %v413
    %v453 = vunpack.c.l.b16 %v414
    %v454 = vunpack.c.l.b16 %v415
    %v455 = vpack.c.b16 %v440, %v439
    %v456 = vpack.c.b16 %v442, %v441
    %v457 = vpack.c.b16 %v444, %v443
    %v458 = vpack.c.b16 %v446, %v445
    %v459 = vpack.c.b16 %v448, %v447
    %v460 = vpack.c.b16 %v450, %v449
    %v461 = vpack.c.b16 %v452, %v451
    %v462 = vpack.c.b16 %v454, %v453
    %471 = vmatprep.subr.bf16.mxu0 0
    %472 = vmatpush1.bf16.msra.mxu0 %v455
    %473 = vmatprep.subr.bf16.mxu0 0
    %474 = vmatpush1.bf16.msra.mxu0 %v456
    %475 = vmatprep.subr.bf16.mxu0 0
    %476 = vmatpush1.bf16.msra.mxu0 %v457
    %477 = vmatprep.subr.bf16.mxu0 0
    %478 = vmatpush1.bf16.msra.mxu0 %v458
    %479 = vmatprep.subr.bf16.mxu0 0
    %480 = vmatpush1.bf16.msra.mxu0 %v459
    %481 = vmatprep.subr.bf16.mxu0 0
    %482 = vmatpush1.bf16.msra.mxu0 %v460
    %483 = vmatprep.subr.bf16.mxu0 0
    %484 = vmatpush1.bf16.msra.mxu0 %v461
    %485 = vmatprep.subr.bf16.mxu0 0
    %486 = vmatpush1.bf16.msra.mxu0 %v462
    %487 = vmatprep.subr.bf16.mxu0 0
    %488 = vmatpush1.bf16.msra.mxu0 0
    %489 = vmatprep.subr.bf16.mxu0 0
    %490 = vmatpush1.bf16.msra.mxu0 0
    %491 = vmatprep.subr.bf16.mxu0 0
    %492 = vmatpush1.bf16.msra.mxu0 0
    %493 = vmatprep.subr.bf16.mxu0 0
    %494 = vmatpush1.bf16.msra.mxu0 0
    %495 = vmatprep.subr.bf16.mxu0 0
    %496 = vmatpush1.bf16.msra.mxu0 0
    %497 = vmatprep.subr.bf16.mxu0 0
    %498 = vmatpush1.bf16.msra.mxu0 0
    %499 = vmatprep.subr.bf16.mxu0 0
    %500 = vmatpush1.bf16.msra.mxu0 0
    %501 = vmatprep.subr.bf16.mxu0 0
    %502 = vmatpush1.bf16.msra.mxu0 0
    %503 = vmatprep.mubr.bf16.mxu0 0
    %504 = vmatmul.mubr.bf16.gmra.mrb[0].mxu0 %v399
    %v505 = vpop.f32.mrb[0].mxu0
    %v506 = vadd.f32 %v421, %v505
    %v507 = vpop.f32.mrb[0].mxu0
    %v508 = vpop.f32.mrb[0].mxu0
    %v509 = vpop.f32.mrb[0].mxu0
    %510 = vdwg.mxu0
    %v511 = vmax.f32 %v506, 0.0
    %v512 = vpack.c.bf16 %v511, %v511
    %v513 = vld [vmem:[#allocation9] sm:$0xf]
    %v514 = vld [vmem:[#allocation9 + $0x4] sm:$0xf]
    %v515 = vld [vmem:[#allocation9 + $0x8] sm:$0xf]
    %v516 = vld [vmem:[#allocation9 + $0xc] sm:$0xf]
    %v517 = vld [vmem:[#allocation9 + $0x10] sm:$0xf]
    %v518 = vld [vmem:[#allocation9 + $0x14] sm:$0xf]
    %v519 = vld [vmem:[#allocation9 + $0x18] sm:$0xf]
    %v520 = vld [vmem:[#allocation9 + $0x1c] sm:$0xf]
    %v521 = vld [vmem:[#allocation9 + $0x20] sm:$0xf]
    %v522 = vld [vmem:[#allocation9 + $0x24] sm:$0xf]
    %v523 = vld [vmem:[#allocation9 + $0x28] sm:$0xf]
    %v524 = vld [vmem:[#allocation9 + $0x2c] sm:$0xf]
    %v525 = vld [vmem:[#allocation9 + $0x30] sm:$0xf]
    %v526 = vld [vmem:[#allocation9 + $0x34] sm:$0xf]
    %v527 = vld [vmem:[#allocation9 + $0x38] sm:$0xf]
    %v528 = vld [vmem:[#allocation9 + $0x3c] sm:$0xf]
    %v529 = vld [vmem:[%s7] sm:$0x1]
    %v531 = vlaneseq
    %v532 = vshrl.u32 %v531, 7
    %v533 = vsub.s32 0, %v532
    %v534 = vrot.slane %v529, %v533
    %v552 = vunpack.c.l.b16 %v513
    %v553 = vunpack.c.l.b16 %v514
    %v554 = vunpack.c.l.b16 %v515
    %v555 = vunpack.c.l.b16 %v516
    %v556 = vunpack.c.l.b16 %v517
    %v557 = vunpack.c.l.b16 %v518
    %v558 = vunpack.c.l.b16 %v519
    %v559 = vunpack.c.l.b16 %v520
    %v560 = vunpack.c.l.b16 %v521
    %v561 = vunpack.c.l.b16 %v522
    %v562 = vunpack.c.l.b16 %v523
    %v563 = vunpack.c.l.b16 %v524
    %v564 = vunpack.c.l.b16 %v525
    %v565 = vunpack.c.l.b16 %v526
    %v566 = vunpack.c.l.b16 %v527
    %v567 = vunpack.c.l.b16 %v528
    %v568 = vpack.c.b16 %v553, %v552
    %v569 = vpack.c.b16 %v555, %v554
    %v570 = vpack.c.b16 %v557, %v556
    %v571 = vpack.c.b16 %v559, %v558
    %v572 = vpack.c.b16 %v561, %v560
    %v573 = vpack.c.b16 %v563, %v562
    %v574 = vpack.c.b16 %v565, %v564
    %v575 = vpack.c.b16 %v567, %v566
    %584 = vmatprep.subr.bf16.mxu0 0
    %585 = vmatpush1.bf16.msra.mxu0 %v568
    %586 = vmatprep.subr.bf16.mxu0 0
    %587 = vmatpush1.bf16.msra.mxu0 %v569
    %588 = vmatprep.subr.bf16.mxu0 0
    %589 = vmatpush1.bf16.msra.mxu0 %v570
    %590 = vmatprep.subr.bf16.mxu0 0
    %591 = vmatpush1.bf16.msra.mxu0 %v571
    %592 = vmatprep.subr.bf16.mxu0 0
    %593 = vmatpush1.bf16.msra.mxu0 %v572
    %594 = vmatprep.subr.bf16.mxu0 0
    %595 = vmatpush1.bf16.msra.mxu0 %v573
    %596 = vmatprep.subr.bf16.mxu0 0
    %597 = vmatpush1.bf16.msra.mxu0 %v574
    %598 = vmatprep.subr.bf16.mxu0 0
    %599 = vmatpush1.bf16.msra.mxu0 %v575
    %600 = vmatprep.subr.bf16.mxu0 0
    %601 = vmatpush1.bf16.msra.mxu0 0
    %602 = vmatprep.subr.bf16.mxu0 0
    %603 = vmatpush1.bf16.msra.mxu0 0
    %604 = vmatprep.subr.bf16.mxu0 0
    %605 = vmatpush1.bf16.msra.mxu0 0
    %606 = vmatprep.subr.bf16.mxu0 0
    %607 = vmatpush1.bf16.msra.mxu0 0
    %608 = vmatprep.subr.bf16.mxu0 0
    %609 = vmatpush1.bf16.msra.mxu0 0
    %610 = vmatprep.subr.bf16.mxu0 0
    %611 = vmatpush1.bf16.msra.mxu0 0
    %612 = vmatprep.subr.bf16.mxu0 0
    %613 = vmatpush1.bf16.msra.mxu0 0
    %614 = vmatprep.subr.bf16.mxu0 0
    %615 = vmatpush1.bf16.msra.mxu0 0
    %616 = vmatprep.mubr.bf16.mxu0 0
    %617 = vmatmul.mubr.bf16.gmra.mrb[0].mxu0 %v512
    %v618 = vpop.f32.mrb[0].mxu0
    %v619 = vadd.f32 %v534, %v618
    %v620 = vpop.f32.mrb[0].mxu0
    %v621 = vpop.f32.mrb[0].mxu0
    %v622 = vpop.f32.mrb[0].mxu0
    %623 = vdwg.mxu0
    %v624 = vmax.f32 %v619, 0.0
    %v625 = vpack.c.bf16 %v624, %v624
    %v626 = vld [vmem:[#allocation11] sm:$0xf]
    %v627 = vld [vmem:[#allocation11 + $0x4] sm:$0xf]
    %v628 = vld [vmem:[#allocation11 + $0x8] sm:$0xf]
    %v629 = vld [vmem:[#allocation11 + $0xc] sm:$0xf]
    %v630 = vld [vmem:[#allocation11 + $0x10] sm:$0xf]
    %v631 = vld [vmem:[#allocation11 + $0x14] sm:$0xf]
    %v632 = vld [vmem:[#allocation11 + $0x18] sm:$0xf]
    %v633 = vld [vmem:[#allocation11 + $0x1c] sm:$0xf]
    %v634 = vld [vmem:[#allocation11 + $0x20] sm:$0xf]
    %v635 = vld [vmem:[#allocation11 + $0x24] sm:$0xf]
    %v636 = vld [vmem:[#allocation11 + $0x28] sm:$0xf]
    %v637 = vld [vmem:[#allocation11 + $0x2c] sm:$0xf]
    %v638 = vld [vmem:[#allocation11 + $0x30] sm:$0xf]
    %v639 = vld [vmem:[#allocation11 + $0x34] sm:$0xf]
    %v640 = vld [vmem:[#allocation11 + $0x38] sm:$0xf]
    %v641 = vld [vmem:[#allocation11 + $0x3c] sm:$0xf]
    %v642 = vld [vmem:[%s9] sm:$0x1]
    %v644 = vlaneseq
    %v645 = vshrl.u32 %v644, 7
    %v646 = vsub.s32 0, %v645
    %v647 = vrot.slane %v642, %v646
    %v665 = vunpack.c.l.b16 %v626
    %v666 = vunpack.c.l.b16 %v627
    %v667 = vunpack.c.l.b16 %v628
    %v668 = vunpack.c.l.b16 %v629
    %v669 = vunpack.c.l.b16 %v630
    %v670 = vunpack.c.l.b16 %v631
    %v671 = vunpack.c.l.b16 %v632
    %v672 = vunpack.c.l.b16 %v633
    %v673 = vunpack.c.l.b16 %v634
    %v674 = vunpack.c.l.b16 %v635
    %v675 = vunpack.c.l.b16 %v636
    %v676 = vunpack.c.l.b16 %v637
    %v677 = vunpack.c.l.b16 %v638
    %v678 = vunpack.c.l.b16 %v639
    %v679 = vunpack.c.l.b16 %v640
    %v680 = vunpack.c.l.b16 %v641
    %v681 = vpack.c.b16 %v666, %v665
    %v682 = vpack.c.b16 %v668, %v667
    %v683 = vpack.c.b16 %v670, %v669
    %v684 = vpack.c.b16 %v672, %v671
    %v685 = vpack.c.b16 %v674, %v673
    %v686 = vpack.c.b16 %v676, %v675
    %v687 = vpack.c.b16 %v678, %v677
    %v688 = vpack.c.b16 %v680, %v679
    %697 = vmatprep.subr.bf16.mxu0 0
    %698 = vmatpush1.bf16.msra.mxu0 %v681
    %699 = vmatprep.subr.bf16.mxu0 0
    %700 = vmatpush1.bf16.msra.mxu0 %v682
    %701 = vmatprep.subr.bf16.mxu0 0
    %702 = vmatpush1.bf16.msra.mxu0 %v683
    %703 = vmatprep.subr.bf16.mxu0 0
    %704 = vmatpush1.bf16.msra.mxu0 %v684
    %705 = vmatprep.subr.bf16.mxu0 0
    %706 = vmatpush1.bf16.msra.mxu0 %v685
    %707 = vmatprep.subr.bf16.mxu0 0
    %708 = vmatpush1.bf16.msra.mxu0 %v686
    %709 = vmatprep.subr.bf16.mxu0 0
    %710 = vmatpush1.bf16.msra.mxu0 %v687
    %711 = vmatprep.subr.bf16.mxu0 0
    %712 = vmatpush1.bf16.msra.mxu0 %v688
    %713 = vmatprep.subr.bf16.mxu0 0
    %714 = vmatpush1.bf16.msra.mxu0 0
    %715 = vmatprep.subr.bf16.mxu0 0
    %716 = vmatpush1.bf16.msra.mxu0 0
    %717 = vmatprep.subr.bf16.mxu0 0
    %718 = vmatpush1.bf16.msra.mxu0 0
    %719 = vmatprep.subr.bf16.mxu0 0
    %720 = vmatpush1.bf16.msra.mxu0 0
    %721 = vmatprep.subr.bf16.mxu0 0
    %722 = vmatpush1.bf16.msra.mxu0 0
    %723 = vmatprep.subr.bf16.mxu0 0
    %724 = vmatpush1.bf16.msra.mxu0 0
    %725 = vmatprep.subr.bf16.mxu0 0
    %726 = vmatpush1.bf16.msra.mxu0 0
    %727 = vmatprep.subr.bf16.mxu0 0
    %728 = vmatpush1.bf16.msra.mxu0 0
    %729 = vmatprep.mubr.bf16.mxu0 0
    %730 = vmatmul.mubr.bf16.gmra.mrb[0].mxu0 %v625
    %v731 = vpop.f32.mrb[0].mxu0
    %v732 = vadd.f32 %v647, %v731
    %v733 = vpop.f32.mrb[0].mxu0
    %v734 = vpop.f32.mrb[0].mxu0
    %v735 = vpop.f32.mrb[0].mxu0
    %736 = vdwg.mxu0
    %737 = vst [vmem:[#allocation12] sm:$0xff] %v732
    %v738 = vlaneseq
    %v739 = vand.u32 %v738, 127
    %v740 = vlaneseq
    %v741 = vshrl.u32 %v740, 7
    %vm742 = vcmp.lt.s32.totalorder %v739, 4
    %vm743 = vcmp.lt.s32.totalorder %v741, 2
    %v744 = vsel %vm742, %v732, -1e+30
    %745 = vmax.xlane.f32.xlu0 %v744
    %v746 = vpop.xlane.xlu0 %745
    %v747 = vsub.f32 %v744, %v746
    %v748 = vmul.f32 %v747, 1.442695
    %v749 = vpow.pop %v748
    %v750 = vsel %vm742, %v749, 0.0
    %751 = vadd.xlane.f32.xlu0 %v750
    %v752 = vpop.xlane.xlu0 %751
    %v753 = vlog2.pop %v752
    %v754 = vmul.f32 %v753, 0.6931472
    %v755 = vadd.f32 %v754, %v746
    %v756 = vsub.f32 %v744, %v755
    %v757 = vld [vmem:[%s1] sm:$0xff]
    %758 = vset.pattern.permute.xlu0 0
    %759 = vperm.xlu0 %758, %v757
    %v760 = vpop.permute.xlu0 %759
    %vm761 = vcmp.eq.s32.totalorder %v760, %v739
    %vm762 = vmand %vm743, %vm761
    %v763 = vsel %vm762, 1.0, 0.0
    %v764 = vmul.f32 %v763, %v756
    %765 = vadd.xlane.f32.xlu0 %v764
    %v766 = vpop.xlane.xlu0 %765
    %v767 = vrot.slane %v766, 4
    %v768 = vadd.f32 %v766, %v767
    %v769 = vrot.slane %v768, 2
    %v770 = vadd.f32 %v768, %v769
    %v771 = vrot.slane %v770, 1
    %v772 = vadd.f32 %v770, %v771
    %s773 = vtos %v772
    %s774 = ssub.f32 0.0, %s773
    %v775 = vrcp.pop 2.0
    %s776 = vtos %v775
    %s777 = smul.f32 %s774, %s776
    %s778 = scalar_lea.smem [#allocation13], 0
    %779 = sst [smem:[%s778]] %s777
    // Predicated region
    $region62: #{tpu_custom_call.1} parent=1 // pred_check
      _
    $region63: #{tpu_custom_call.1} parent=1 // pred_check_branch
      %781 = sbr.rel (0) target = $region65
    $region64: #{tpu_custom_call.1} parent=1 // pred_region
      %s783 = ssub.s32 128, 128
      %784 = vsyncadd [#allocation4], %s783
      %s786 = sshll.u32 [#allocation12], 4
      %s787 = int_to_ptr.vmem [resolvable:$true] %s786
      %789 = dma.vmem_to_hbm [thread:$0]  %s787, 128, %s10, [#allocation4]
    $region65: #{tpu_custom_call.1} parent=1 // pred_fallthru
      _
    // Predicated region
    $region66: #{tpu_custom_call.1} parent=1 // pred_check
      _
    $region67: #{tpu_custom_call.1} parent=1 // pred_check_branch
      %791 = sbr.rel (0) target = $region69
    $region68: #{tpu_custom_call.1} parent=1 // pred_region
      %s793 = ssub.s32 16, 16
      %794 = vsyncadd [#allocation5], %s793
      %797 = dma.smem_to_hbm [#allocation13], 16, %s11, [#allocation5]
    $region69: #{tpu_custom_call.1} parent=1 // pred_fallthru
      _
    // Predicated region
    $region70: #{tpu_custom_call.1} parent=1 // pred_check
      _
    $region71: #{tpu_custom_call.1} parent=1 // pred_check_branch
      %799 = sbr.rel (0) target = $region73
    $region72: #{tpu_custom_call.1} parent=1 // pred_region
      %800 = dma.done [#allocation4], 128
    $region73: #{tpu_custom_call.1} parent=1 // pred_fallthru
      _
    // Predicated region
    $region74: #{tpu_custom_call.1} parent=1 // pred_check
      _
    $region75: #{tpu_custom_call.1} parent=1 // pred_check_branch
      %802 = sbr.rel (0) target = $region77
    $region76: #{tpu_custom_call.1} parent=1 // pred_region
      %803 = dma.done [#allocation5], 16
    $region77: #{tpu_custom_call.1} parent=1 // pred_fallthru
      _
    %804 = sfence
    %805 = vsyncpa [#allocation3], 1
    %806 = vsyncpa [#allocation7], 1
    %807 = vsyncpa [#allocation10], 1
    %808 = vsyncpa [#allocation4], 1
    %809 = vsyncpa [#allocation5], 1

</llo_original>
